<compile_context>
chip_gen: v6e
topology: v6e:2x2x1
jax: 0.10.0
libtpu: 0.0.40
codegen_flags: <defaults>
</compile_context>

<pallas_src>
import jax
import jax.numpy as jnp
from jax.experimental import pallas as pl
from jax.experimental.pallas import tpu as pltpu

BN_EPS = 1e-5
LEAKY_SLOPE = 0.2


def _leaky(v):
    # Equivalent to LeakyReLU(0.2) for slope < 1.
    return jnp.maximum(v, LEAKY_SLOPE * v)


def _batchnorm_train(h, gamma, beta):
    # PyTorch BatchNorm1d (training): biased variance over the batch axis.
    mean = jnp.mean(h, axis=0, keepdims=True)
    centered = h - mean
    var = jnp.mean(centered * centered, axis=0, keepdims=True)
    return centered * jax.lax.rsqrt(var + BN_EPS) * gamma + beta


def discriminator_kernel(
    xy_ref,                       # [B, image_size**2 + num_classes]  f32
    w1_ref, b1_ref,               # block-diag fc1_x|fc1_y   (bf16 W, f32 b)
    w2_ref, b2_ref, g2_ref, be2_ref,
    w3_ref, b3_ref, g3_ref, be3_ref,
    w4_ref, b4_ref,               # fc4 as a (1, ndf) f32 row + (1,1) bias
    out_ref,
):
    f32 = jnp.float32
    bf16 = jnp.bfloat16

    # --- fc1_x + fc1_y + concat, fused into a single block-diagonal matmul ---
    h = jnp.dot(xy_ref[...].astype(bf16), w1_ref[...],
                preferred_element_type=f32) + b1_ref[...]
    h = _leaky(h)

    # --- fc2 -> BN -> leaky ---
    h = jnp.dot(h.astype(bf16), w2_ref[...],
                preferred_element_type=f32) + b2_ref[...]
    h = _leaky(_batchnorm_train(h, g2_ref[...], be2_ref[...]))

    # --- fc3 -> BN -> leaky ---
    h = jnp.dot(h.astype(bf16), w3_ref[...],
                preferred_element_type=f32) + b3_ref[...]
    h = _leaky(_batchnorm_train(h, g3_ref[...], be3_ref[...]))

    # --- fc4 (N=1) on the VPU: multiply by the weight row, reduce over lanes ---
    logits = jnp.sum(h * w4_ref[...], axis=-1, keepdims=True) + b4_ref[...]

    # --- sigmoid (exp on EUP, reciprocal on EUP) ---
    out_ref[...] = pl.reciprocal(1.0 + jnp.exp(-logits), approx=False)


def discriminator_forward(x, y, params):
    """x: [B, image_size**2] f32, y: [B, num_classes] f32 -> [B, 1] f32."""
    B = x.shape[0]

    # Stack conditioning input next to the image features so fc1_x / fc1_y /
    # concat collapse into one matmul against the block-diagonal W1.
    xy = jnp.concatenate([x, y], axis=1)

    operands = (
        xy,
        params["w1"], params["b1"],
        params["w2"], params["b2"], params["g2"], params["be2"],
        params["w3"], params["b3"], params["g3"], params["be3"],
        params["w4"], params["b4"],
    )

    def full_spec(arr):
        # Whole array as a single VMEM-resident block (shapes are tiny).
        zeros = tuple(0 for _ in arr.shape)
        return pl.BlockSpec(arr.shape, lambda zeros=zeros: zeros)

    out_shape = jax.ShapeDtypeStruct((B, 1), jnp.float32)

    return pl.pallas_call(
        discriminator_kernel,
        out_shape=out_shape,
        in_specs=[full_spec(a) for a in operands],
        out_specs=pl.BlockSpec((B, 1), lambda: (0, 0)),
        compiler_params=pltpu.CompilerParams(vmem_limit_bytes=4 << 20),
    )(*operands)


def init_params(key, ndf, num_classes, image_size, mean=0.0, std=0.02):
    """Mirrors Discriminator.weight_init(mean, std): Linear weights ~ N(mean,
    std), Linear biases = 0, BN gamma = 1, beta = 0.  Linear weights are stored
    transposed (in_features, out_features); fc1_x / fc1_y are fused into a
    block-diagonal W1.  MXU weights are stored in bf16, fc4 row stays in f32
    (it is applied on the VPU)."""
    keys = jax.random.split(key, 5)
    d_in_x = image_size ** 2

    def lin(k, fan_in, fan_out):
        w = mean + std * jax.random.normal(k, (fan_in, fan_out), dtype=jnp.float32)
        b = jnp.zeros((1, fan_out), dtype=jnp.float32)
        return w, b

    w1x, b1x = lin(keys[0], d_in_x, ndf * 4)
    w1y, b1y = lin(keys[1], num_classes, ndf * 4)
    w2, b2 = lin(keys[2], ndf * 8, ndf * 2)
    w3, b3 = lin(keys[3], ndf * 2, ndf)
    w4, b4 = lin(keys[4], ndf, 1)

    # Block-diagonal fusion of fc1_x and fc1_y:
    #   [x | y] @ [[w1x, 0], [0, w1y]] + [b1x | b1y]
    #     == concat(x @ w1x + b1x, y @ w1y + b1y)
    w1 = jnp.zeros((d_in_x + num_classes, ndf * 8), jnp.float32)
    w1 = w1.at[:d_in_x, : ndf * 4].set(w1x)
    w1 = w1.at[d_in_x:, ndf * 4:].set(w1y)
    b1 = jnp.concatenate([b1x, b1y], axis=1)

    return {
        "w1": w1.astype(jnp.bfloat16), "b1": b1,
        "w2": w2.astype(jnp.bfloat16), "b2": b2,
        "g2": jnp.ones((1, ndf * 2), jnp.float32),
        "be2": jnp.zeros((1, ndf * 2), jnp.float32),
        "w3": w3.astype(jnp.bfloat16), "b3": b3,
        "g3": jnp.ones((1, ndf), jnp.float32),
        "be3": jnp.zeros((1, ndf), jnp.float32),
        # fc4 applied on the VPU: keep as an f32 (1, ndf) row + (1, 1) bias.
        "w4": w4.reshape(1, ndf), "b4": b4.reshape(1, 1),
    }


def reference_forward(x, y, p):
    """Pure-JAX reference mirroring the kernel's bf16-matmul / f32-accumulate
    arithmetic (so the comparison is apples-to-apples)."""
    bf16 = jnp.bfloat16
    f32 = jnp.float32

    xy = jnp.concatenate([x, y], axis=1)
    h = jnp.dot(xy.astype(bf16), p["w1"], preferred_element_type=f32) + p["b1"]
    h = jnp.maximum(h, LEAKY_SLOPE * h)

    def bn(h, g, b):
        m = jnp.mean(h, axis=0, keepdims=True)
        c = h - m
        v = jnp.mean(c * c, axis=0, keepdims=True)
        return c * jax.lax.rsqrt(v + BN_EPS) * g + b

    h = jnp.dot(h.astype(bf16), p["w2"], preferred_element_type=f32) + p["b2"]
    h = bn(h, p["g2"], p["be2"])
    h = jnp.maximum(h, LEAKY_SLOPE * h)

    h = jnp.dot(h.astype(bf16), p["w3"], preferred_element_type=f32) + p["b3"]
    h = bn(h, p["g3"], p["be3"])
    h = jnp.maximum(h, LEAKY_SLOPE * h)

    logits = jnp.sum(h * p["w4"], axis=-1, keepdims=True) + p["b4"]
    return 1.0 / (1.0 + jnp.exp(-logits))


if __name__ == "__main__":
    # Small, module-consistent shapes.
    ndf = 32
    num_classes = 10
    image_size = 16   # image_size**2 = 256 input features
    batch = 8

    key = jax.random.PRNGKey(0)
    kx, ky, kp = jax.random.split(key, 3)

    x = jax.random.normal(kx, (batch, image_size ** 2), dtype=jnp.float32)
    labels = jax.random.randint(ky, (batch,), 0, num_classes)
    y = jax.nn.one_hot(labels, num_classes, dtype=jnp.float32)

    params = init_params(kp, ndf, num_classes, image_size)

    out = discriminator_forward(x, y, params)
    out = jax.block_until_ready(out)

    ref = reference_forward(x, y, params)
    assert out.shape == (batch, 1), out.shape
    assert jnp.allclose(out, ref, atol=1e-4, rtol=1e-4), (out, ref)

    print("KERNEL_OK")
</pallas_src>

<mosaic_0001>
module attributes {stable_mosaic.version = 11 : i64} {
  func.func @discriminator_kernel(%arg0: memref<8x266xf32, #tpu.memory_space<vmem>>, %arg1: memref<266x256xbf16, #tpu.memory_space<vmem>>, %arg2: memref<1x256xf32, #tpu.memory_space<vmem>>, %arg3: memref<256x64xbf16, #tpu.memory_space<vmem>>, %arg4: memref<1x64xf32, #tpu.memory_space<vmem>>, %arg5: memref<1x64xf32, #tpu.memory_space<vmem>>, %arg6: memref<1x64xf32, #tpu.memory_space<vmem>>, %arg7: memref<64x32xbf16, #tpu.memory_space<vmem>>, %arg8: memref<1x32xf32, #tpu.memory_space<vmem>>, %arg9: memref<1x32xf32, #tpu.memory_space<vmem>>, %arg10: memref<1x32xf32, #tpu.memory_space<vmem>>, %arg11: memref<1x32xf32, #tpu.memory_space<vmem>>, %arg12: memref<1x1xf32, #tpu.memory_space<vmem>>, %arg13: memref<8x1xf32, #tpu.memory_space<vmem>>) attributes {dimension_semantics = [], scalar_prefetch = 0 : i64, scratch_operands = 0 : i64, tpu.core_type = #tpu.core_type<tc>} {
    %c0 = arith.constant 0 : index
    %c0_0 = arith.constant 0 : index
    %0 = vector.load %arg0[%c0, %c0_0] : memref<8x266xf32, #tpu.memory_space<vmem>>, vector<8x266xf32>
    %1 = arith.truncf %0 : vector<8x266xf32> to vector<8x266xbf16>
    %c0_1 = arith.constant 0 : index
    %c0_2 = arith.constant 0 : index
    %2 = vector.load %arg1[%c0_1, %c0_2] : memref<266x256xbf16, #tpu.memory_space<vmem>>, vector<266x256xbf16>
    %cst = arith.constant dense<0.000000e+00> : vector<8x256xf32>
    %3 = tpu.matmul %1, %2, %cst {dimension_numbers = #tpu.dot_dimension_numbers<[1], [0], [0], [1], [0, 0, 1, 1], [], []>} : vector<8x266xbf16>, vector<266x256xbf16>, vector<8x256xf32> -> vector<8x256xf32>
    %c0_3 = arith.constant 0 : index
    %c0_4 = arith.constant 0 : index
    %4 = vector.load %arg2[%c0_3, %c0_4] : memref<1x256xf32, #tpu.memory_space<vmem>>, vector<1x256xf32>
    %5 = vector.broadcast %4 : vector<1x256xf32> to vector<8x256xf32>
    %6 = arith.addf %3, %5 : vector<8x256xf32>
    %cst_5 = arith.constant 2.000000e-01 : f32
    %7 = vector.broadcast %cst_5 : f32 to vector<8x256xf32>
    %8 = arith.mulf %7, %6 : vector<8x256xf32>
    %9 = arith.maximumf %6, %8 : vector<8x256xf32>
    %10 = arith.truncf %9 : vector<8x256xf32> to vector<8x256xbf16>
    %c0_6 = arith.constant 0 : index
    %c0_7 = arith.constant 0 : index
    %11 = vector.load %arg3[%c0_6, %c0_7] : memref<256x64xbf16, #tpu.memory_space<vmem>>, vector<256x64xbf16>
    %cst_8 = arith.constant dense<0.000000e+00> : vector<8x64xf32>
    %12 = tpu.matmul %10, %11, %cst_8 {dimension_numbers = #tpu.dot_dimension_numbers<[1], [0], [0], [1], [0, 0, 1, 1], [], []>} : vector<8x256xbf16>, vector<256x64xbf16>, vector<8x64xf32> -> vector<8x64xf32>
    %c0_9 = arith.constant 0 : index
    %c0_10 = arith.constant 0 : index
    %13 = vector.load %arg4[%c0_9, %c0_10] : memref<1x64xf32, #tpu.memory_space<vmem>>, vector<1x64xf32>
    %14 = vector.broadcast %13 : vector<1x64xf32> to vector<8x64xf32>
    %15 = arith.addf %12, %14 : vector<8x64xf32>
    %c0_11 = arith.constant 0 : index
    %c0_12 = arith.constant 0 : index
    %16 = vector.load %arg5[%c0_11, %c0_12] : memref<1x64xf32, #tpu.memory_space<vmem>>, vector<1x64xf32>
    %c0_13 = arith.constant 0 : index
    %c0_14 = arith.constant 0 : index
    %17 = vector.load %arg6[%c0_13, %c0_14] : memref<1x64xf32, #tpu.memory_space<vmem>>, vector<1x64xf32>
    %cst_15 = arith.constant dense<0.000000e+00> : vector<64xf32>
    %18 = vector.multi_reduction <add>, %15, %cst_15 [0] : vector<8x64xf32> to vector<64xf32>
    %19 = vector.shape_cast %18 : vector<64xf32> to vector<1x64xf32>
    %cst_16 = arith.constant 8.000000e+00 : f32
    %20 = vector.broadcast %cst_16 : f32 to vector<1x64xf32>
    %21 = arith.divf %19, %20 : vector<1x64xf32>
    %22 = vector.broadcast %21 : vector<1x64xf32> to vector<8x64xf32>
    %23 = arith.subf %15, %22 : vector<8x64xf32>
    %24 = arith.mulf %23, %23 : vector<8x64xf32>
    %cst_17 = arith.constant dense<0.000000e+00> : vector<64xf32>
    %25 = vector.multi_reduction <add>, %24, %cst_17 [0] : vector<8x64xf32> to vector<64xf32>
    %26 = vector.shape_cast %25 : vector<64xf32> to vector<1x64xf32>
    %cst_18 = arith.constant 8.000000e+00 : f32
    %27 = vector.broadcast %cst_18 : f32 to vector<1x64xf32>
    %28 = arith.divf %26, %27 : vector<1x64xf32>
    %cst_19 = arith.constant 9.99999974E-6 : f32
    %29 = vector.broadcast %cst_19 : f32 to vector<1x64xf32>
    %30 = arith.addf %28, %29 : vector<1x64xf32>
    %31 = math.rsqrt %30 : vector<1x64xf32>
    %32 = vector.broadcast %31 : vector<1x64xf32> to vector<8x64xf32>
    %33 = arith.mulf %23, %32 : vector<8x64xf32>
    %34 = vector.broadcast %16 : vector<1x64xf32> to vector<8x64xf32>
    %35 = arith.mulf %33, %34 : vector<8x64xf32>
    %36 = vector.broadcast %17 : vector<1x64xf32> to vector<8x64xf32>
    %37 = arith.addf %35, %36 : vector<8x64xf32>
    %cst_20 = arith.constant 2.000000e-01 : f32
    %38 = vector.broadcast %cst_20 : f32 to vector<8x64xf32>
    %39 = arith.mulf %38, %37 : vector<8x64xf32>
    %40 = arith.maximumf %37, %39 : vector<8x64xf32>
    %41 = arith.truncf %40 : vector<8x64xf32> to vector<8x64xbf16>
    %c0_21 = arith.constant 0 : index
    %c0_22 = arith.constant 0 : index
    %42 = vector.load %arg7[%c0_21, %c0_22] : memref<64x32xbf16, #tpu.memory_space<vmem>>, vector<64x32xbf16>
    %cst_23 = arith.constant dense<0.000000e+00> : vector<8x32xf32>
    %43 = tpu.matmul %41, %42, %cst_23 {dimension_numbers = #tpu.dot_dimension_numbers<[1], [0], [0], [1], [0, 0, 1, 1], [], []>} : vector<8x64xbf16>, vector<64x32xbf16>, vector<8x32xf32> -> vector<8x32xf32>
    %c0_24 = arith.constant 0 : index
    %c0_25 = arith.constant 0 : index
    %44 = vector.load %arg8[%c0_24, %c0_25] : memref<1x32xf32, #tpu.memory_space<vmem>>, vector<1x32xf32>
    %45 = vector.broadcast %44 : vector<1x32xf32> to vector<8x32xf32>
    %46 = arith.addf %43, %45 : vector<8x32xf32>
    %c0_26 = arith.constant 0 : index
    %c0_27 = arith.constant 0 : index
    %47 = vector.load %arg9[%c0_26, %c0_27] : memref<1x32xf32, #tpu.memory_space<vmem>>, vector<1x32xf32>
    %c0_28 = arith.constant 0 : index
    %c0_29 = arith.constant 0 : index
    %48 = vector.load %arg10[%c0_28, %c0_29] : memref<1x32xf32, #tpu.memory_space<vmem>>, vector<1x32xf32>
    %cst_30 = arith.constant dense<0.000000e+00> : vector<32xf32>
    %49 = vector.multi_reduction <add>, %46, %cst_30 [0] : vector<8x32xf32> to vector<32xf32>
    %50 = vector.shape_cast %49 : vector<32xf32> to vector<1x32xf32>
    %cst_31 = arith.constant 8.000000e+00 : f32
    %51 = vector.broadcast %cst_31 : f32 to vector<1x32xf32>
    %52 = arith.divf %50, %51 : vector<1x32xf32>
    %53 = vector.broadcast %52 : vector<1x32xf32> to vector<8x32xf32>
    %54 = arith.subf %46, %53 : vector<8x32xf32>
    %55 = arith.mulf %54, %54 : vector<8x32xf32>
    %cst_32 = arith.constant dense<0.000000e+00> : vector<32xf32>
    %56 = vector.multi_reduction <add>, %55, %cst_32 [0] : vector<8x32xf32> to vector<32xf32>
    %57 = vector.shape_cast %56 : vector<32xf32> to vector<1x32xf32>
    %cst_33 = arith.constant 8.000000e+00 : f32
    %58 = vector.broadcast %cst_33 : f32 to vector<1x32xf32>
    %59 = arith.divf %57, %58 : vector<1x32xf32>
    %cst_34 = arith.constant 9.99999974E-6 : f32
    %60 = vector.broadcast %cst_34 : f32 to vector<1x32xf32>
    %61 = arith.addf %59, %60 : vector<1x32xf32>
    %62 = math.rsqrt %61 : vector<1x32xf32>
    %63 = vector.broadcast %62 : vector<1x32xf32> to vector<8x32xf32>
    %64 = arith.mulf %54, %63 : vector<8x32xf32>
    %65 = vector.broadcast %47 : vector<1x32xf32> to vector<8x32xf32>
    %66 = arith.mulf %64, %65 : vector<8x32xf32>
    %67 = vector.broadcast %48 : vector<1x32xf32> to vector<8x32xf32>
    %68 = arith.addf %66, %67 : vector<8x32xf32>
    %cst_35 = arith.constant 2.000000e-01 : f32
    %69 = vector.broadcast %cst_35 : f32 to vector<8x32xf32>
    %70 = arith.mulf %69, %68 : vector<8x32xf32>
    %71 = arith.maximumf %68, %70 : vector<8x32xf32>
    %c0_36 = arith.constant 0 : index
    %c0_37 = arith.constant 0 : index
    %72 = vector.load %arg11[%c0_36, %c0_37] : memref<1x32xf32, #tpu.memory_space<vmem>>, vector<1x32xf32>
    %73 = vector.broadcast %72 : vector<1x32xf32> to vector<8x32xf32>
    %74 = arith.mulf %71, %73 : vector<8x32xf32>
    %cst_38 = arith.constant dense<0.000000e+00> : vector<8xf32>
    %75 = vector.multi_reduction <add>, %74, %cst_38 [1] : vector<8x32xf32> to vector<8xf32>
    %76 = vector.shape_cast %75 : vector<8xf32> to vector<8x1xf32>
    %c0_39 = arith.constant 0 : index
    %c0_40 = arith.constant 0 : index
    %77 = vector.load %arg12[%c0_39, %c0_40] : memref<1x1xf32, #tpu.memory_space<vmem>>, vector<1x1xf32>
    %78 = vector.broadcast %77 : vector<1x1xf32> to vector<8x1xf32>
    %79 = arith.addf %76, %78 : vector<8x1xf32>
    %cst_41 = arith.constant 0.000000e+00 : f32
    %80 = vector.broadcast %cst_41 : f32 to vector<8x1xf32>
    %81 = arith.subf %80, %79 : vector<8x1xf32>
    %82 = math.exp %81 : vector<8x1xf32>
    %cst_42 = arith.constant 1.000000e+00 : f32
    %83 = vector.broadcast %cst_42 : f32 to vector<8x1xf32>
    %84 = arith.addf %83, %82 : vector<8x1xf32>
    %85 = tpu.reciprocal %84 : vector<8x1xf32> -> vector<8x1xf32>
    %c0_43 = arith.constant 0 : index
    %c0_44 = arith.constant 0 : index
    %86 = vector.load %arg13[%c0_43, %c0_44] : memref<8x1xf32, #tpu.memory_space<vmem>>, vector<8x1xf32>
    tpu.vector_store %arg13[%c0_43, %c0_44], %85 {strides = array<i32>} : memref<8x1xf32, #tpu.memory_space<vmem>>, vector<8x1xf32>,
    return
  }
}

</mosaic_0001>

<llo_original>
// kernel: tpu_custom_call.1
$region0: #{tpu_custom_call.1}
  #allocation0 [shape = 'u32[]', space=smem, size = 0x4, offset = 0x4, fixed_abs, tag = 'smem constant byte address 0x4 - core index']
  #allocation1 [shape = 'u32[144,128]{1,0:T(1,128)}', space=vmem, size = 0x12000, scoped, tag = 'internal scratch']
  #allocation2 [shape = 'f32[1,1]{1,0:T(1,128)S(1)}', space=vmem, size = 0x200, scoped, tag = 'scoped memory for tpu_custom_call.1']
  %s0 = inlined_call_operand.vmem [shape: f32[8,266], index: 0, kind: input, shape index: {}]
  %s1 = inlined_call_operand.hbm [shape: bf16[266,256], index: 1, kind: input, shape index: {}]
  %s2 = inlined_call_operand.vmem [shape: f32[1,256], index: 2, kind: input, shape index: {}]
  %s3 = inlined_call_operand.vmem [shape: bf16[256,64], index: 3, kind: input, shape index: {}]
  %s4 = inlined_call_operand.vmem [shape: f32[1,64], index: 4, kind: input, shape index: {}]
  %s5 = inlined_call_operand.vmem [shape: f32[1,64], index: 5, kind: input, shape index: {}]
  %s6 = inlined_call_operand.vmem [shape: f32[1,64], index: 6, kind: input, shape index: {}]
  %s7 = inlined_call_operand.vmem [shape: bf16[64,32], index: 7, kind: input, shape index: {}]
  %s8 = inlined_call_operand.vmem [shape: f32[1,32], index: 8, kind: input, shape index: {}]
  %s9 = inlined_call_operand.vmem [shape: f32[1,32], index: 9, kind: input, shape index: {}]
  %s10 = inlined_call_operand.vmem [shape: f32[1,32], index: 10, kind: input, shape index: {}]
  %s11 = inlined_call_operand.vmem [shape: f32[1,32], index: 11, kind: input, shape index: {}]
  %s12 = inlined_call_operand.<no memory space> [shape: f32[1,1], index: 12, kind: input, shape index: {}]
  %s13 = inlined_call_operand.vmem [shape: f32[8,1], index: 13, kind: output, shape index: {}]
  %s14 = sld [smem:[#allocation0]]
  $region66: #{tpu_custom_call.1} parent=0
    _
  %s16 = ssub.s32 1, %s14
  %s17 = scalar_select 0, %s16, %s14
  %v18 = vstv %s12
  %19 = vst [vmem:[#allocation2] sm:$0x1] %v18
  $region1: #{tpu_custom_call.1} parent=0
    #allocation3 [shape = 'u8[139264]{0}', space=vmem, size = 0x22000, scoped, tag = 'input window, operand 1, single buffered']
    #allocation4 [shape = 's32[1]{0}', space=sflag, size = 0x4, scoped, tag = 'scoped memory for tpu_custom_call.1']
    %20 = vsyncpa [#allocation4], 0
    // Predicated region
    $region2: #{tpu_custom_call.1} parent=1 // pred_check
      _
    $region3: #{tpu_custom_call.1} parent=1 // pred_check_branch
      %22 = sbr.rel (0) target = $region5
    $region4: #{tpu_custom_call.1} parent=1 // pred_region
      _
    $region5: #{tpu_custom_call.1} parent=1 // pred_fallthru
      _
    // Predicated region
    $region6: #{tpu_custom_call.1} parent=1 // pred_check
      _
    $region7: #{tpu_custom_call.1} parent=1 // pred_check_branch
      %24 = sbr.rel (0) target = $region9
    $region8: #{tpu_custom_call.1} parent=1 // pred_region
      %s26 = ssub.s32 4352, 4352
      %27 = vsyncadd [#allocation4], %s26
      %s28 = sshll.u32 [#allocation3], 4
      %s29 = int_to_ptr.vmem [resolvable:$true] %s28
      %34 = dma.hbm_to_vmem [thread:$0]  %s1, 4352, %s29, [#allocation4], 128, 128, 8
    $region9: #{tpu_custom_call.1} parent=1 // pred_fallthru
      _
    // Predicated region
    $region10: #{tpu_custom_call.1} parent=1 // pred_check
      _
    $region11: #{tpu_custom_call.1} parent=1 // pred_check_branch
      %36 = sbr.rel (0) target = $region13
    $region12: #{tpu_custom_call.1} parent=1 // pred_region
      _
    $region13: #{tpu_custom_call.1} parent=1 // pred_fallthru
      _
    // Predicated region
    $region14: #{tpu_custom_call.1} parent=1 // pred_check
      _
    $region15: #{tpu_custom_call.1} parent=1 // pred_check_branch
      %38 = sbr.rel (0) target = $region17
    $region16: #{tpu_custom_call.1} parent=1 // pred_region
      _
    $region17: #{tpu_custom_call.1} parent=1 // pred_fallthru
      _
    // Predicated region
    $region18: #{tpu_custom_call.1} parent=1 // pred_check
      _
    $region19: #{tpu_custom_call.1} parent=1 // pred_check_branch
      %40 = sbr.rel (0) target = $region21
    $region20: #{tpu_custom_call.1} parent=1 // pred_region
      _
    $region21: #{tpu_custom_call.1} parent=1 // pred_fallthru
      _
    // Predicated region
    $region22: #{tpu_custom_call.1} parent=1 // pred_check
      _
    $region23: #{tpu_custom_call.1} parent=1 // pred_check_branch
      %42 = sbr.rel (0) target = $region25
    $region24: #{tpu_custom_call.1} parent=1 // pred_region
      _
    $region25: #{tpu_custom_call.1} parent=1 // pred_fallthru
      _
    // Predicated region
    $region26: #{tpu_custom_call.1} parent=1 // pred_check
      _
    $region27: #{tpu_custom_call.1} parent=1 // pred_check_branch
      %44 = sbr.rel (0) target = $region29
    $region28: #{tpu_custom_call.1} parent=1 // pred_region
      _
    $region29: #{tpu_custom_call.1} parent=1 // pred_fallthru
      _
    // Predicated region
    $region30: #{tpu_custom_call.1} parent=1 // pred_check
      _
    $region31: #{tpu_custom_call.1} parent=1 // pred_check_branch
      %46 = sbr.rel (0) target = $region33
    $region32: #{tpu_custom_call.1} parent=1 // pred_region
      _
    $region33: #{tpu_custom_call.1} parent=1 // pred_fallthru
      _
    // Predicated region
    $region34: #{tpu_custom_call.1} parent=1 // pred_check
      _
    $region35: #{tpu_custom_call.1} parent=1 // pred_check_branch
      %48 = sbr.rel (0) target = $region37
    $region36: #{tpu_custom_call.1} parent=1 // pred_region
      _
    $region37: #{tpu_custom_call.1} parent=1 // pred_fallthru
      _
    // Predicated region
    $region38: #{tpu_custom_call.1} parent=1 // pred_check
      _
    $region39: #{tpu_custom_call.1} parent=1 // pred_check_branch
      %50 = sbr.rel (0) target = $region41
    $region40: #{tpu_custom_call.1} parent=1 // pred_region
      _
    $region41: #{tpu_custom_call.1} parent=1 // pred_fallthru
      _
    // Predicated region
    $region42: #{tpu_custom_call.1} parent=1 // pred_check
      _
    $region43: #{tpu_custom_call.1} parent=1 // pred_check_branch
      %52 = sbr.rel (0) target = $region45
    $region44: #{tpu_custom_call.1} parent=1 // pred_region
      _
    $region45: #{tpu_custom_call.1} parent=1 // pred_fallthru
      _
    // Predicated region
    $region46: #{tpu_custom_call.1} parent=1 // pred_check
      _
    $region47: #{tpu_custom_call.1} parent=1 // pred_check_branch
      %54 = sbr.rel (0) target = $region49
    $region48: #{tpu_custom_call.1} parent=1 // pred_region
      _
    $region49: #{tpu_custom_call.1} parent=1 // pred_fallthru
      _
    // Predicated region
    $region50: #{tpu_custom_call.1} parent=1 // pred_check
      _
    $region51: #{tpu_custom_call.1} parent=1 // pred_check_branch
      %56 = sbr.rel (0) target = $region53
    $region52: #{tpu_custom_call.1} parent=1 // pred_region
      _
    $region53: #{tpu_custom_call.1} parent=1 // pred_fallthru
      _
    // Predicated region
    $region54: #{tpu_custom_call.1} parent=1 // pred_check
      _
    $region55: #{tpu_custom_call.1} parent=1 // pred_check_branch
      %58 = sbr.rel (0) target = $region57
    $region56: #{tpu_custom_call.1} parent=1 // pred_region
      %59 = dma.done [#allocation4], 4352
    $region57: #{tpu_custom_call.1} parent=1 // pred_fallthru
      _
    %v61 = vld [vmem:[%s0] sm:$0xff]
    %v62 = vld [vmem:[%s0 + $0x8] sm:$0xff]
    %v63 = vld [vmem:[%s0 + $0x10] sm:$0xff]
    %v64 = vpack.c.bf16 %v61, %v61
    %v65 = vpack.c.bf16 %v62, %v62
    %v66 = vpack.c.bf16 %v63, %v63
    %v67 = vld [vmem:[#allocation3] sm:$0xff]
    %v68 = vld [vmem:[#allocation3 + $0x8] sm:$0xff]
    %v69 = vld [vmem:[#allocation3 + $0x10] sm:$0xff]
    %v70 = vld [vmem:[#allocation3 + $0x18] sm:$0xff]
    %v71 = vld [vmem:[#allocation3 + $0x20] sm:$0xff]
    %v72 = vld [vmem:[#allocation3 + $0x28] sm:$0xff]
    %v73 = vld [vmem:[#allocation3 + $0x30] sm:$0xff]
    %v74 = vld [vmem:[#allocation3 + $0x38] sm:$0xff]
    %v75 = vld [vmem:[#allocation3 + $0x40] sm:$0xff]
    %v76 = vld [vmem:[#allocation3 + $0x48] sm:$0xff]
    %v77 = vld [vmem:[#allocation3 + $0x50] sm:$0xff]
    %v78 = vld [vmem:[#allocation3 + $0x58] sm:$0xff]
    %v79 = vld [vmem:[#allocation3 + $0x60] sm:$0xff]
    %v80 = vld [vmem:[#allocation3 + $0x68] sm:$0xff]
    %v81 = vld [vmem:[#allocation3 + $0x70] sm:$0xff]
    %v82 = vld [vmem:[#allocation3 + $0x78] sm:$0xff]
    %v83 = vld [vmem:[#allocation3 + $0x80] sm:$0xff]
    %v84 = vld [vmem:[#allocation3 + $0x88] sm:$0xff]
    %v85 = vld [vmem:[#allocation3 + $0x90] sm:$0xff]
    %v86 = vld [vmem:[#allocation3 + $0x98] sm:$0xff]
    %v87 = vld [vmem:[#allocation3 + $0xa0] sm:$0xff]
    %v88 = vld [vmem:[#allocation3 + $0xa8] sm:$0xff]
    %v89 = vld [vmem:[#allocation3 + $0xb0] sm:$0xff]
    %v90 = vld [vmem:[#allocation3 + $0xb8] sm:$0xff]
    %v91 = vld [vmem:[#allocation3 + $0xc0] sm:$0xff]
    %v92 = vld [vmem:[#allocation3 + $0xc8] sm:$0xff]
    %v93 = vld [vmem:[#allocation3 + $0xd0] sm:$0xff]
    %v94 = vld [vmem:[#allocation3 + $0xd8] sm:$0xff]
    %v95 = vld [vmem:[#allocation3 + $0xe0] sm:$0xff]
    %v96 = vld [vmem:[#allocation3 + $0xe8] sm:$0xff]
    %v97 = vld [vmem:[#allocation3 + $0xf0] sm:$0xff]
    %v98 = vld [vmem:[#allocation3 + $0xf8] sm:$0xff]
    %v99 = vld [vmem:[#allocation3 + $0x100] sm:$0xff]
    %v100 = vld [vmem:[#allocation3 + $0x108] sm:$0x11]
    %v101 = vld [vmem:[%s2] sm:$0x3]
    %v103 = vlaneseq
    %v104 = vshrl.u32 %v103, 7
    %v105 = vsub.s32 0, %v104
    %v106 = vrot.slane %v101, %v105
    %v107 = vlaneseq
    %v108 = vshrl.u32 %v107, 7
    %v109 = vsub.s32 1, %v108
    %v110 = vrot.slane %v101, %v109
    %v147 = vunpack.c.l.b16 %v67
    %v148 = vunpack.c.h.b16 %v67
    %v149 = vunpack.c.l.b16 %v68
    %v150 = vunpack.c.h.b16 %v68
    %v151 = vunpack.c.l.b16 %v69
    %v152 = vunpack.c.h.b16 %v69
    %v153 = vunpack.c.l.b16 %v70
    %v154 = vunpack.c.h.b16 %v70
    %v155 = vunpack.c.l.b16 %v71
    %v156 = vunpack.c.h.b16 %v71
    %v157 = vunpack.c.l.b16 %v72
    %v158 = vunpack.c.h.b16 %v72
    %v159 = vunpack.c.l.b16 %v73
    %v160 = vunpack.c.h.b16 %v73
    %v161 = vunpack.c.l.b16 %v74
    %v162 = vunpack.c.h.b16 %v74
    %v163 = vunpack.c.l.b16 %v75
    %v164 = vunpack.c.h.b16 %v75
    %v165 = vunpack.c.l.b16 %v76
    %v166 = vunpack.c.h.b16 %v76
    %v167 = vunpack.c.l.b16 %v77
    %v168 = vunpack.c.h.b16 %v77
    %v169 = vunpack.c.l.b16 %v78
    %v170 = vunpack.c.h.b16 %v78
    %v171 = vunpack.c.l.b16 %v79
    %v172 = vunpack.c.h.b16 %v79
    %v173 = vunpack.c.l.b16 %v80
    %v174 = vunpack.c.h.b16 %v80
    %v175 = vunpack.c.l.b16 %v81
    %v176 = vunpack.c.h.b16 %v81
    %v177 = vunpack.c.l.b16 %v82
    %v178 = vunpack.c.h.b16 %v82
    %v179 = vunpack.c.l.b16 %v83
    %v180 = vunpack.c.h.b16 %v83
    %v181 = vunpack.c.l.b16 %v84
    %v182 = vunpack.c.h.b16 %v84
    %v183 = vunpack.c.l.b16 %v85
    %v184 = vunpack.c.h.b16 %v85
    %v185 = vunpack.c.l.b16 %v86
    %v186 = vunpack.c.h.b16 %v86
    %v187 = vunpack.c.l.b16 %v87
    %v188 = vunpack.c.h.b16 %v87
    %v189 = vunpack.c.l.b16 %v88
    %v190 = vunpack.c.h.b16 %v88
    %v191 = vunpack.c.l.b16 %v89
    %v192 = vunpack.c.h.b16 %v89
    %v193 = vunpack.c.l.b16 %v90
    %v194 = vunpack.c.h.b16 %v90
    %v195 = vunpack.c.l.b16 %v91
    %v196 = vunpack.c.h.b16 %v91
    %v197 = vunpack.c.l.b16 %v92
    %v198 = vunpack.c.h.b16 %v92
    %v199 = vunpack.c.l.b16 %v93
    %v200 = vunpack.c.h.b16 %v93
    %v201 = vunpack.c.l.b16 %v94
    %v202 = vunpack.c.h.b16 %v94
    %v203 = vunpack.c.l.b16 %v95
    %v204 = vunpack.c.h.b16 %v95
    %v205 = vunpack.c.l.b16 %v96
    %v206 = vunpack.c.h.b16 %v96
    %v207 = vunpack.c.l.b16 %v97
    %v208 = vunpack.c.h.b16 %v97
    %v209 = vunpack.c.l.b16 %v98
    %v210 = vunpack.c.h.b16 %v98
    %v211 = vunpack.c.l.b16 %v99
    %v212 = vunpack.c.h.b16 %v99
    %v213 = vunpack.c.l.b16 %v100
    %v214 = vunpack.c.h.b16 %v100
    %v215 = vpack.c.b16 %v149, %v147
    %v216 = vpack.c.b16 %v150, %v148
    %v217 = vpack.c.b16 %v153, %v151
    %v218 = vpack.c.b16 %v154, %v152
    %v219 = vpack.c.b16 %v157, %v155
    %v220 = vpack.c.b16 %v158, %v156
    %v221 = vpack.c.b16 %v161, %v159
    %v222 = vpack.c.b16 %v162, %v160
    %v223 = vpack.c.b16 %v165, %v163
    %v224 = vpack.c.b16 %v166, %v164
    %v225 = vpack.c.b16 %v169, %v167
    %v226 = vpack.c.b16 %v170, %v168
    %v227 = vpack.c.b16 %v173, %v171
    %v228 = vpack.c.b16 %v174, %v172
    %v229 = vpack.c.b16 %v177, %v175
    %v230 = vpack.c.b16 %v178, %v176
    %v231 = vpack.c.b16 %v181, %v179
    %v232 = vpack.c.b16 %v182, %v180
    %v233 = vpack.c.b16 %v185, %v183
    %v234 = vpack.c.b16 %v186, %v184
    %v235 = vpack.c.b16 %v189, %v187
    %v236 = vpack.c.b16 %v190, %v188
    %v237 = vpack.c.b16 %v193, %v191
    %v238 = vpack.c.b16 %v194, %v192
    %v239 = vpack.c.b16 %v197, %v195
    %v240 = vpack.c.b16 %v198, %v196
    %v241 = vpack.c.b16 %v201, %v199
    %v242 = vpack.c.b16 %v202, %v200
    %v243 = vpack.c.b16 %v205, %v203
    %v244 = vpack.c.b16 %v206, %v204
    %v245 = vpack.c.b16 %v209, %v207
    %v246 = vpack.c.b16 %v210, %v208
    %v247 = vpack.c.b16 %v213, %v211
    %v248 = vpack.c.b16 %v214, %v212
    %vm281 = vcmask 80896
    %v283 = vsel %vm281, %v66, 0
    %vm285 = vcmask 1044480
    %v287 = vsel %vm285, %v247, 0
    %v290 = vsel %vm285, %v248, 0
    %292 = vmatprep.subr.bf16.mxu0 %v230
    %293 = vmatpush1.bf16.msra.mxu0 %v229
    %294 = vmatprep.subr.bf16.mxu0 %v228
    %295 = vmatpush1.bf16.msra.mxu0 %v227
    %296 = vmatprep.subr.bf16.mxu0 %v226
    %297 = vmatpush1.bf16.msra.mxu0 %v225
    %298 = vmatprep.subr.bf16.mxu0 %v224
    %299 = vmatpush1.bf16.msra.mxu0 %v223
    %300 = vmatprep.subr.bf16.mxu0 %v222
    %301 = vmatpush1.bf16.msra.mxu0 %v221
    %302 = vmatprep.subr.bf16.mxu0 %v220
    %303 = vmatpush1.bf16.msra.mxu0 %v219
    %304 = vmatprep.subr.bf16.mxu0 %v218
    %305 = vmatpush1.bf16.msra.mxu0 %v217
    %306 = vmatprep.subr.bf16.mxu0 %v216
    %307 = vmatpush1.bf16.msra.mxu0 %v215
    %308 = vmatprep.subr.bf16.mxu0 %v246
    %309 = vmatpush2.bf16.msra.mxu0 %v245
    %310 = vmatprep.subr.bf16.mxu0 %v244
    %311 = vmatpush2.bf16.msra.mxu0 %v243
    %312 = vmatprep.subr.bf16.mxu0 %v242
    %313 = vmatpush2.bf16.msra.mxu0 %v241
    %314 = vmatprep.subr.bf16.mxu0 %v240
    %315 = vmatpush2.bf16.msra.mxu0 %v239
    %316 = vmatprep.subr.bf16.mxu0 %v238
    %317 = vmatpush2.bf16.msra.mxu0 %v237
    %318 = vmatprep.subr.bf16.mxu0 %v236
    %319 = vmatpush2.bf16.msra.mxu0 %v235
    %320 = vmatprep.subr.bf16.mxu0 %v234
    %321 = vmatpush2.bf16.msra.mxu0 %v233
    %322 = vmatprep.subr.bf16.mxu0 %v232
    %323 = vmatpush2.bf16.msra.mxu0 %v231
    %324 = vmatprep.mubr.bf16.mxu0 %v65
    %325 = vmatmul.mubr.bf16.gmra.mxu0 %v64
    %v326 = vpop.f32.mrf.mxu0
    %v327 = vadd.f32 %v106, %v326
    %v328 = vpop.f32.mrf.mxu0
    %v329 = vadd.f32 %v110, %v328
    %v330 = vpop.f32.mrf.mxu0
    %v331 = vpop.f32.mrf.mxu0
    %332 = vdwg.mxu0
    %333 = vmatprep.subr.bf16.mxu0 0
    %334 = vmatpush1.bf16.msra.mxu0 0
    %335 = vmatprep.subr.bf16.mxu0 0
    %336 = vmatpush1.bf16.msra.mxu0 0
    %337 = vmatprep.subr.bf16.mxu0 0
    %338 = vmatpush1.bf16.msra.mxu0 0
    %339 = vmatprep.subr.bf16.mxu0 0
    %340 = vmatpush1.bf16.msra.mxu0 0
    %341 = vmatprep.subr.bf16.mxu0 0
    %342 = vmatpush1.bf16.msra.mxu0 0
    %343 = vmatprep.subr.bf16.mxu0 0
    %344 = vmatpush1.bf16.msra.mxu0 0
    %345 = vmatprep.subr.bf16.mxu0 0
    %346 = vmatpush1.bf16.msra.mxu0 0
    %347 = vmatprep.subr.bf16.mxu0 %v290
    %348 = vmatpush1.bf16.msra.mxu0 %v287
    %349 = vmatprep.subr.bf16.mxu0 0
    %350 = vmatpush2.bf16.msra.mxu0 0
    %351 = vmatprep.subr.bf16.mxu0 0
    %352 = vmatpush2.bf16.msra.mxu0 0
    %353 = vmatprep.subr.bf16.mxu0 0
    %354 = vmatpush2.bf16.msra.mxu0 0
    %355 = vmatprep.subr.bf16.mxu0 0
    %356 = vmatpush2.bf16.msra.mxu0 0
    %357 = vmatprep.subr.bf16.mxu0 0
    %358 = vmatpush2.bf16.msra.mxu0 0
    %359 = vmatprep.subr.bf16.mxu0 0
    %360 = vmatpush2.bf16.msra.mxu0 0
    %361 = vmatprep.subr.bf16.mxu0 0
    %362 = vmatpush2.bf16.msra.mxu0 0
    %363 = vmatprep.subr.bf16.mxu0 0
    %364 = vmatpush2.bf16.msra.mxu0 0
    %365 = vmatprep.mubr.bf16.mxu0 0
    %366 = vmatmul.mubr.bf16.gmra.mxu0 %v283
    %v367 = vpop.f32.mrf.mxu0
    %v368 = vadd.f32 %v327, %v367
    %v369 = vpop.f32.mrf.mxu0
    %v370 = vadd.f32 %v329, %v369
    %v371 = vpop.f32.mrf.mxu0
    %v372 = vpop.f32.mrf.mxu0
    %373 = vdwg.mxu0
    %v374 = vmul.f32 %v368, 0.2
    %v375 = vmul.f32 %v370, 0.2
    %v376 = vmax.f32 %v368, %v374
    %v377 = vmax.f32 %v370, %v375
    %v378 = vpack.c.bf16 %v376, %v376
    %v379 = vpack.c.bf16 %v377, %v377
    %v380 = vld [vmem:[%s3] sm:$0xf]
    %v381 = vld [vmem:[%s3 + $0x4] sm:$0xf]
    %v382 = vld [vmem:[%s3 + $0x8] sm:$0xf]
    %v383 = vld [vmem:[%s3 + $0xc] sm:$0xf]
    %v384 = vld [vmem:[%s3 + $0x10] sm:$0xf]
    %v385 = vld [vmem:[%s3 + $0x14] sm:$0xf]
    %v386 = vld [vmem:[%s3 + $0x18] sm:$0xf]
    %v387 = vld [vmem:[%s3 + $0x1c] sm:$0xf]
    %v388 = vld [vmem:[%s3 + $0x20] sm:$0xf]
    %v389 = vld [vmem:[%s3 + $0x24] sm:$0xf]
    %v390 = vld [vmem:[%s3 + $0x28] sm:$0xf]
    %v391 = vld [vmem:[%s3 + $0x2c] sm:$0xf]
    %v392 = vld [vmem:[%s3 + $0x30] sm:$0xf]
    %v393 = vld [vmem:[%s3 + $0x34] sm:$0xf]
    %v394 = vld [vmem:[%s3 + $0x38] sm:$0xf]
    %v395 = vld [vmem:[%s3 + $0x3c] sm:$0xf]
    %v396 = vld [vmem:[%s3 + $0x40] sm:$0xf]
    %v397 = vld [vmem:[%s3 + $0x44] sm:$0xf]
    %v398 = vld [vmem:[%s3 + $0x48] sm:$0xf]
    %v399 = vld [vmem:[%s3 + $0x4c] sm:$0xf]
    %v400 = vld [vmem:[%s3 + $0x50] sm:$0xf]
    %v401 = vld [vmem:[%s3 + $0x54] sm:$0xf]
    %v402 = vld [vmem:[%s3 + $0x58] sm:$0xf]
    %v403 = vld [vmem:[%s3 + $0x5c] sm:$0xf]
    %v404 = vld [vmem:[%s3 + $0x60] sm:$0xf]
    %v405 = vld [vmem:[%s3 + $0x64] sm:$0xf]
    %v406 = vld [vmem:[%s3 + $0x68] sm:$0xf]
    %v407 = vld [vmem:[%s3 + $0x6c] sm:$0xf]
    %v408 = vld [vmem:[%s3 + $0x70] sm:$0xf]
    %v409 = vld [vmem:[%s3 + $0x74] sm:$0xf]
    %v410 = vld [vmem:[%s3 + $0x78] sm:$0xf]
    %v411 = vld [vmem:[%s3 + $0x7c] sm:$0xf]
    %v412 = vld [vmem:[%s4] sm:$0x1]
    %v414 = vlaneseq
    %v415 = vshrl.u32 %v414, 7
    %v416 = vsub.s32 0, %v415
    %v417 = vrot.slane %v412, %v416
    %v451 = vunpack.c.l.b16 %v380
    %v452 = vunpack.c.l.b16 %v381
    %v453 = vunpack.c.l.b16 %v382
    %v454 = vunpack.c.l.b16 %v383
    %v455 = vunpack.c.l.b16 %v384
    %v456 = vunpack.c.l.b16 %v385
    %v457 = vunpack.c.l.b16 %v386
    %v458 = vunpack.c.l.b16 %v387
    %v459 = vunpack.c.l.b16 %v388
    %v460 = vunpack.c.l.b16 %v389
    %v461 = vunpack.c.l.b16 %v390
    %v462 = vunpack.c.l.b16 %v391
    %v463 = vunpack.c.l.b16 %v392
    %v464 = vunpack.c.l.b16 %v393
    %v465 = vunpack.c.l.b16 %v394
    %v466 = vunpack.c.l.b16 %v395
    %v467 = vunpack.c.l.b16 %v396
    %v468 = vunpack.c.l.b16 %v397
    %v469 = vunpack.c.l.b16 %v398
    %v470 = vunpack.c.l.b16 %v399
    %v471 = vunpack.c.l.b16 %v400
    %v472 = vunpack.c.l.b16 %v401
    %v473 = vunpack.c.l.b16 %v402
    %v474 = vunpack.c.l.b16 %v403
    %v475 = vunpack.c.l.b16 %v404
    %v476 = vunpack.c.l.b16 %v405
    %v477 = vunpack.c.l.b16 %v406
    %v478 = vunpack.c.l.b16 %v407
    %v479 = vunpack.c.l.b16 %v408
    %v480 = vunpack.c.l.b16 %v409
    %v481 = vunpack.c.l.b16 %v410
    %v482 = vunpack.c.l.b16 %v411
    %v483 = vpack.c.b16 %v452, %v451
    %v484 = vpack.c.b16 %v454, %v453
    %v485 = vpack.c.b16 %v456, %v455
    %v486 = vpack.c.b16 %v458, %v457
    %v487 = vpack.c.b16 %v460, %v459
    %v488 = vpack.c.b16 %v462, %v461
    %v489 = vpack.c.b16 %v464, %v463
    %v490 = vpack.c.b16 %v466, %v465
    %v491 = vpack.c.b16 %v468, %v467
    %v492 = vpack.c.b16 %v470, %v469
    %v493 = vpack.c.b16 %v472, %v471
    %v494 = vpack.c.b16 %v474, %v473
    %v495 = vpack.c.b16 %v476, %v475
    %v496 = vpack.c.b16 %v478, %v477
    %v497 = vpack.c.b16 %v480, %v479
    %v498 = vpack.c.b16 %v482, %v481
    %515 = vmatprep.subr.bf16.mxu0 0
    %516 = vmatpush1.bf16.msra.mxu0 %v490
    %517 = vmatprep.subr.bf16.mxu0 0
    %518 = vmatpush1.bf16.msra.mxu0 %v489
    %519 = vmatprep.subr.bf16.mxu0 0
    %520 = vmatpush1.bf16.msra.mxu0 %v488
    %521 = vmatprep.subr.bf16.mxu0 0
    %522 = vmatpush1.bf16.msra.mxu0 %v487
    %523 = vmatprep.subr.bf16.mxu0 0
    %524 = vmatpush1.bf16.msra.mxu0 %v486
    %525 = vmatprep.subr.bf16.mxu0 0
    %526 = vmatpush1.bf16.msra.mxu0 %v485
    %527 = vmatprep.subr.bf16.mxu0 0
    %528 = vmatpush1.bf16.msra.mxu0 %v484
    %529 = vmatprep.subr.bf16.mxu0 0
    %530 = vmatpush1.bf16.msra.mxu0 %v483
    %531 = vmatprep.subr.bf16.mxu0 0
    %532 = vmatpush2.bf16.msra.mxu0 %v498
    %533 = vmatprep.subr.bf16.mxu0 0
    %534 = vmatpush2.bf16.msra.mxu0 %v497
    %535 = vmatprep.subr.bf16.mxu0 0
    %536 = vmatpush2.bf16.msra.mxu0 %v496
    %537 = vmatprep.subr.bf16.mxu0 0
    %538 = vmatpush2.bf16.msra.mxu0 %v495
    %539 = vmatprep.subr.bf16.mxu0 0
    %540 = vmatpush2.bf16.msra.mxu0 %v494
    %541 = vmatprep.subr.bf16.mxu0 0
    %542 = vmatpush2.bf16.msra.mxu0 %v493
    %543 = vmatprep.subr.bf16.mxu0 0
    %544 = vmatpush2.bf16.msra.mxu0 %v492
    %545 = vmatprep.subr.bf16.mxu0 0
    %546 = vmatpush2.bf16.msra.mxu0 %v491
    %547 = vmatprep.mubr.bf16.mxu0 %v379
    %548 = vmatmul.mubr.bf16.gmra.mxu0 %v378
    %v549 = vpop.f32.mrf.mxu0
    %v550 = vadd.f32 %v417, %v549
    %v551 = vpop.f32.mrf.mxu0
    %v552 = vpop.f32.mrf.mxu0
    %v553 = vpop.f32.mrf.mxu0
    %554 = vdwg.mxu0
    %v555 = vld [vmem:[%s5] sm:$0x1]
    %v556 = vld [vmem:[%s6] sm:$0x1]
    %vm557 = vcmask 523264
    %v558 = vsel %vm557, %v550, 0.0
    %v559 = vrot.slane %v558, 4
    %v560 = vadd.f32 %v558, %v559
    %v561 = vrot.slane %v560, 2
    %v562 = vadd.f32 %v560, %v561
    %v563 = vrot.slane %v562, 1
    %v564 = vadd.f32 %v562, %v563
    %v565 = vrcp.pop 8.0
    %v566 = vmul.f32 %v564, %v565
    %v567 = vsub.f32 %v550, %v566
    %v568 = vmul.f32 %v567, %v567
    %v569 = vsel %vm557, %v568, 0.0
    %v570 = vrot.slane %v569, 4
    %v571 = vadd.f32 %v569, %v570
    %v572 = vrot.slane %v571, 2
    %v573 = vadd.f32 %v571, %v572
    %v574 = vrot.slane %v573, 1
    %v575 = vadd.f32 %v573, %v574
    %v576 = vmul.f32 %v575, %v565
    %v577 = vadd.f32 %v576, 1e-05
    %v578 = vrsqrt.pop %v577
    %v579 = vmul.f32 %v567, %v578
    %v581 = vlaneseq
    %v582 = vshrl.u32 %v581, 7
    %v583 = vsub.s32 0, %v582
    %v584 = vrot.slane %v555, %v583
    %v586 = vmul.f32 %v579, %v584
    %v588 = vlaneseq
    %v589 = vshrl.u32 %v588, 7
    %v590 = vsub.s32 0, %v589
    %v591 = vrot.slane %v556, %v590
    %v593 = vadd.f32 %v586, %v591
    %v594 = vmul.f32 %v593, 0.2
    %v595 = vmax.f32 %v593, %v594
    %v596 = vpack.c.bf16 %v595, %v595
    %v597 = vld [vmem:[%s7] sm:$0xf]
    %v598 = vld [vmem:[%s7 + $0x4] sm:$0xf]
    %v599 = vld [vmem:[%s7 + $0x8] sm:$0xf]
    %v600 = vld [vmem:[%s7 + $0xc] sm:$0xf]
    %v601 = vld [vmem:[%s7 + $0x10] sm:$0xf]
    %v602 = vld [vmem:[%s7 + $0x14] sm:$0xf]
    %v603 = vld [vmem:[%s7 + $0x18] sm:$0xf]
    %v604 = vld [vmem:[%s7 + $0x1c] sm:$0xf]
    %v605 = vld [vmem:[%s8] sm:$0x1]
    %v607 = vlaneseq
    %v608 = vshrl.u32 %v607, 7
    %v609 = vsub.s32 0, %v608
    %v610 = vrot.slane %v605, %v609
    %v620 = vunpack.c.l.b16 %v597
    %v621 = vunpack.c.l.b16 %v598
    %v622 = vunpack.c.l.b16 %v599
    %v623 = vunpack.c.l.b16 %v600
    %v624 = vunpack.c.l.b16 %v601
    %v625 = vunpack.c.l.b16 %v602
    %v626 = vunpack.c.l.b16 %v603
    %v627 = vunpack.c.l.b16 %v604
    %v628 = vpack.c.b16 %v621, %v620
    %v629 = vpack.c.b16 %v623, %v622
    %v630 = vpack.c.b16 %v625, %v624
    %v631 = vpack.c.b16 %v627, %v626
    %v637 = vsel %vm557, %v596, 0
    %639 = vmatprep.subr.bf16.mxu0 0
    %640 = vmatpush1.bf16.msra.mxu0 0
    %641 = vmatprep.subr.bf16.mxu0 0
    %642 = vmatpush1.bf16.msra.mxu0 0
    %643 = vmatprep.subr.bf16.mxu0 0
    %644 = vmatpush1.bf16.msra.mxu0 0
    %645 = vmatprep.subr.bf16.mxu0 0
    %646 = vmatpush1.bf16.msra.mxu0 0
    %647 = vmatprep.subr.bf16.mxu0 0
    %648 = vmatpush1.bf16.msra.mxu0 %v631
    %649 = vmatprep.subr.bf16.mxu0 0
    %650 = vmatpush1.bf16.msra.mxu0 %v630
    %651 = vmatprep.subr.bf16.mxu0 0
    %652 = vmatpush1.bf16.msra.mxu0 %v629
    %653 = vmatprep.subr.bf16.mxu0 0
    %654 = vmatpush1.bf16.msra.mxu0 %v628
    %655 = vmatprep.subr.bf16.mxu0 0
    %656 = vmatpush2.bf16.msra.mxu0 0
    %657 = vmatprep.subr.bf16.mxu0 0
    %658 = vmatpush2.bf16.msra.mxu0 0
    %659 = vmatprep.subr.bf16.mxu0 0
    %660 = vmatpush2.bf16.msra.mxu0 0
    %661 = vmatprep.subr.bf16.mxu0 0
    %662 = vmatpush2.bf16.msra.mxu0 0
    %663 = vmatprep.subr.bf16.mxu0 0
    %664 = vmatpush2.bf16.msra.mxu0 0
    %665 = vmatprep.subr.bf16.mxu0 0
    %666 = vmatpush2.bf16.msra.mxu0 0
    %667 = vmatprep.subr.bf16.mxu0 0
    %668 = vmatpush2.bf16.msra.mxu0 0
    %669 = vmatprep.subr.bf16.mxu0 0
    %670 = vmatpush2.bf16.msra.mxu0 0
    %671 = vmatprep.mubr.bf16.mxu0 0
    %672 = vmatmul.mubr.bf16.gmra.mxu0 %v637
    %v673 = vpop.f32.mrf.mxu0
    %v674 = vadd.f32 %v610, %v673
    %v675 = vpop.f32.mrf.mxu0
    %v676 = vpop.f32.mrf.mxu0
    %v677 = vpop.f32.mrf.mxu0
    %678 = vdwg.mxu0
    %v679 = vld [vmem:[%s9] sm:$0x1]
    %v680 = vld [vmem:[%s10] sm:$0x1]
    %vm681 = vcmask 261120
    %v682 = vsel %vm681, %v674, 0.0
    %v683 = vrot.slane %v682, 4
    %v684 = vadd.f32 %v682, %v683
    %v685 = vrot.slane %v684, 2
    %v686 = vadd.f32 %v684, %v685
    %v687 = vrot.slane %v686, 1
    %v688 = vadd.f32 %v686, %v687
    %v689 = vmul.f32 %v688, %v565
    %v690 = vsub.f32 %v674, %v689
    %v691 = vmul.f32 %v690, %v690
    %v692 = vsel %vm681, %v691, 0.0
    %v693 = vrot.slane %v692, 4
    %v694 = vadd.f32 %v692, %v693
    %v695 = vrot.slane %v694, 2
    %v696 = vadd.f32 %v694, %v695
    %v697 = vrot.slane %v696, 1
    %v698 = vadd.f32 %v696, %v697
    %v699 = vmul.f32 %v698, %v565
    %v700 = vadd.f32 %v699, 1e-05
    %v701 = vrsqrt.pop %v700
    %v702 = vmul.f32 %v690, %v701
    %v704 = vlaneseq
    %v705 = vshrl.u32 %v704, 7
    %v706 = vsub.s32 0, %v705
    %v707 = vrot.slane %v679, %v706
    %v709 = vmul.f32 %v702, %v707
    %v711 = vlaneseq
    %v712 = vshrl.u32 %v711, 7
    %v713 = vsub.s32 0, %v712
    %v714 = vrot.slane %v680, %v713
    %v716 = vadd.f32 %v709, %v714
    %v717 = vmul.f32 %v716, 0.2
    %v718 = vmax.f32 %v716, %v717
    %v719 = vld [vmem:[%s11] sm:$0x1]
    %v721 = vlaneseq
    %v722 = vshrl.u32 %v721, 7
    %v723 = vsub.s32 0, %v722
    %v724 = vrot.slane %v719, %v723
    %v726 = vmul.f32 %v718, %v724
    %v727 = vsel %vm681, %v726, 0.0
    %728 = vadd.xlane.f32.xlu0 %v727
    %v729 = vpop.xlane.xlu0 %728
    %v730 = vld [vmem:[#allocation2] sm:$0x1]
    %v732 = vlaneseq
    %v733 = vshrl.u32 %v732, 7
    %v734 = vsub.s32 0, %v733
    %v735 = vrot.slane %v730, %v734
    %v737 = vadd.f32 %v729, %v735
    %v738 = vsub.f32 0.0, %v737
    %v739 = vmul.f32 %v738, 1.442695
    %v740 = vpow.pop %v739
    %v741 = vadd.f32 %v740, 1.0
    %v742 = vrcp.pop %v741
    %vm743 = vcmask 7168
    %744 = vst.msk [vmem:[%s13] sm:$0xff] %vm743, %v742
    // Predicated region
    $region58: #{tpu_custom_call.1} parent=1 // pred_check
      _
    $region59: #{tpu_custom_call.1} parent=1 // pred_check_branch
      %746 = sbr.rel (0) target = $region61
    $region60: #{tpu_custom_call.1} parent=1 // pred_region
      _
    $region61: #{tpu_custom_call.1} parent=1 // pred_fallthru
      _
    // Predicated region
    $region62: #{tpu_custom_call.1} parent=1 // pred_check
      _
    $region63: #{tpu_custom_call.1} parent=1 // pred_check_branch
      %748 = sbr.rel (0) target = $region65
    $region64: #{tpu_custom_call.1} parent=1 // pred_region
      _
    $region65: #{tpu_custom_call.1} parent=1 // pred_fallthru
      _
    %749 = vsyncpa [#allocation4], 1

</llo_original>
